<compile_context>
chip_gen: v5e
topology: v5e:2x2
jax: 0.10.0
libtpu: 0.0.40
codegen_flags: <defaults>
</compile_context>

<pallas_src>
import jax
import jax.numpy as jnp
import numpy as np
from jax.experimental import pallas as pl
from jax.experimental.pallas import tpu as pltpu

# ---------- padded layout constants (lane-dense, bf16-sublane aligned) ----------
NP, EP, GP = 128, 128, 16          # padded nodes / edges / graphs
DH, DOUT, DVE = 128, 128, 16       # padded hidden / output / narrow (d_v,d_e) dims

# wide graph-structure slab (128 lanes): [a_hat | A2 | s_dst | pool]
DO_AHAT, DO_A2, DO_SDST, DO_POOL = 0, NP, 2 * NP, 3 * NP
D_ROWS = 3 * NP + GP               # 400

# narrow feature slab (16 lanes): [x | edge_attr]
XO_X, XO_E = 0, NP
XE_ROWS = NP + EP                  # 256

# parameter slab (128 lanes): [wg | bg | wl1 | W_e_eff | b_node | wo | bo]
PO_WG = 0
PO_BG = PO_WG + DVE                # 16   (bias replicated over NP rows)
PO_WL1 = PO_BG + NP                # 144
PO_WE = PO_WL1 + DH                # 272
PO_BN = PO_WE + DVE                # 288
PO_WO = PO_BN + NP                 # 416
PO_BO = PO_WO + DH                 # 544  (bias replicated over GP rows)
P_ROWS = PO_BO + GP                # 560


def _forward_math(a_hat, a2, s_dst, pool, x, eattr,
                  wg, bg, wl1, we_eff, b_node, wo, bo):
    """Fused forward pass. bf16 MXU operands, f32 accumulation. Shared by the
    Pallas kernel and the matched-precision plain-JAX reference."""
    f32, bf16 = jnp.float32, jnp.bfloat16

    # GCNConv (contraction reordered):  x1 = relu((a_hat @ x) @ wg + bg)
    ax = jnp.dot(a_hat, x, preferred_element_type=f32)                    # (NP, DVE)
    x1 = jnp.maximum(
        jnp.dot(ax.astype(bf16), wg, preferred_element_type=f32)
        + bg.astype(f32), 0.0)                                            # (NP, DH)

    # EdgeGCN, scatter distributed over the message sum (exact fusion):
    #   x2 = relu(A2 @ (x1 @ wl1) + (s_dst @ eattr) @ (we @ wl2) + b_node)
    h_node = jnp.dot(x1.astype(bf16), wl1, preferred_element_type=f32)    # (NP, DH)
    node_path = jnp.dot(a2, h_node.astype(bf16), preferred_element_type=f32)
    se = jnp.dot(s_dst, eattr, preferred_element_type=f32)                # (NP, DVE)
    edge_path = jnp.dot(se.astype(bf16), we_eff, preferred_element_type=f32)
    x2 = jnp.maximum(node_path + edge_path + b_node.astype(f32), 0.0)     # (NP, DH)

    # global_mean_pool + output linear
    pooled = jnp.dot(pool, x2.astype(bf16), preferred_element_type=f32)   # (GP, DH)
    return jnp.dot(pooled.astype(bf16), wo, preferred_element_type=f32) \
        + bo.astype(f32)                                                  # (GP, DOUT)


def graph_encoder_kernel(data_ref, xe_ref, p_ref, out_ref):
    out_ref[...] = _forward_math(
        data_ref[DO_AHAT:DO_AHAT + NP, :],
        data_ref[DO_A2:DO_A2 + NP, :],
        data_ref[DO_SDST:DO_SDST + NP, :],
        data_ref[DO_POOL:DO_POOL + GP, :],
        xe_ref[XO_X:XO_X + NP, :],
        xe_ref[XO_E:XO_E + EP, :],
        p_ref[PO_WG:PO_WG + DVE, :],
        p_ref[PO_BG:PO_BG + NP, :],
        p_ref[PO_WL1:PO_WL1 + DH, :],
        p_ref[PO_WE:PO_WE + DVE, :],
        p_ref[PO_BN:PO_BN + NP, :],
        p_ref[PO_WO:PO_WO + DH, :],
        p_ref[PO_BO:PO_BO + GP, :],
    )


def graph_encoder_pallas(data_slab, xe_slab, p_slab, n_graphs, out_dim):
    vmem = pl.BlockSpec(memory_space=pltpu.MemorySpace.VMEM)
    out = pl.pallas_call(
        graph_encoder_kernel,
        out_shape=jax.ShapeDtypeStruct((GP, DOUT), jnp.float32),
        in_specs=[vmem, vmem, vmem],
        out_specs=vmem,
    )(data_slab, xe_slab, p_slab)
    return out[:n_graphs, :out_dim]


if __name__ == "__main__":
    # ---- problem sizes ------------------------------------------------------
    d_v, d_e, d_h, output_dim = 8, 4, 32, 16
    N = 12                       # nodes (2 graphs x 6 nodes)
    num_uni = 10                 # unique undirected edges
    n_graphs = 2

    key = jax.random.PRNGKey(0)
    k = iter(jax.random.split(key, 16))

    x = jax.random.normal(next(k), (N, d_v), dtype=jnp.float32)
    batch = np.array([0] * 6 + [1] * 6, dtype=np.int32)
    uni_edges = np.array([(i, i + 1) for i in range(5)] +
                         [(6 + i, 7 + i) for i in range(5)], dtype=np.int32)
    edge_attr = jax.random.normal(next(k), (num_uni, d_e), dtype=jnp.float32)

    # bidirectional edge_index, interleaved (u,v),(v,u) per unique edge (matches
    # edge_attr.repeat(1,2).reshape(...) pairing in EdgeGCN.forward)
    src_bi = np.empty(2 * num_uni, dtype=np.int32)
    dst_bi = np.empty(2 * num_uni, dtype=np.int32)
    src_bi[0::2], dst_bi[0::2] = uni_edges[:, 0], uni_edges[:, 1]
    src_bi[1::2], dst_bi[1::2] = uni_edges[:, 1], uni_edges[:, 0]

    # --- GCNConv normalized adjacency  A_hat = D^-1/2 (A + I) D^-1/2 ---------
    A = np.zeros((N, N), dtype=np.float32)
    np.add.at(A, (dst_bi, src_bi), 1.0)
    A += np.eye(N, dtype=np.float32)
    deg = A.sum(axis=1)
    dinv = deg ** -0.5
    a_hat = dinv[:, None] * A * dinv[None, :]

    # --- EdgeGCN edge set: duplicated attrs + self-loops (attr filled with 1.0)
    eattr_full = np.concatenate(
        [np.repeat(np.asarray(edge_attr), 2, axis=0),
         np.ones((N, d_e), np.float32)], axis=0)
    src_full = np.concatenate([src_bi, np.arange(N, dtype=np.int32)])
    dst_full = np.concatenate([dst_bi, np.arange(N, dtype=np.int32)])
    E = src_full.shape[0]                                   # 2*num_uni + N = 32
    g_src = np.zeros((E, N), np.float32)
    g_src[np.arange(E), src_full] = 1.0                     # gather x[src]
    s_dst = np.zeros((N, E), np.float32)
    s_dst[dst_full, np.arange(E)] = 1.0                     # scatter-add over dst

    # --- global_mean_pool matrix ---------------------------------------------
    counts = np.bincount(batch, minlength=n_graphs).astype(np.float32)
    pool = np.zeros((n_graphs, N), dtype=np.float32)
    pool[batch, np.arange(N)] = 1.0 / counts[batch]

    # --- deterministic parameters (PyTorch Linear: y = x @ W.T + b) ----------
    def lin_params(key, fan_in, fan_out):
        kw, kb = jax.random.split(key)
        w_t = 0.1 * jax.random.normal(kw, (fan_in, fan_out), dtype=jnp.float32)
        b = 0.1 * jax.random.normal(kb, (1, fan_out), dtype=jnp.float32)
        return np.asarray(w_t), np.asarray(b)

    wg, bg = lin_params(next(k), d_v, d_h)          # GCNConv weight + bias
    we, be = lin_params(next(k), d_e, d_h)          # EdgeGCN.lin_edges
    wl_t, bl = lin_params(next(k), 2 * d_h, d_h)    # EdgeGCN.lin (in = 2*d_h)
    wl1, wl2 = wl_t[:d_h, :], wl_t[d_h:, :]         # split for [x_j | edge_feat]
    wo, bo = lin_params(next(k), d_h, output_dim)   # GraphEncoder.lin
    # TODO(synk): EdgeGCN.lin_nodes and message()'s `dist` are dead code in the
    # reference forward pass, so they are intentionally not materialized.

    # ---- host-side algebraic fusion (exact) ----------------------------------
    A2 = s_dst @ g_src                              # (N, N) collapsed gather->scatter
    w_e_eff = we @ wl2                              # (d_e, d_h)
    deg_dst = s_dst.sum(axis=1)                     # messages landing on each node
    b_node = deg_dst[:, None] * (be @ wl2 + bl)     # (N, d_h)

    x_np = np.asarray(x)

    # ---- pack everything into three bf16 lane-dense slabs --------------------
    d_slab = np.zeros((D_ROWS, NP), np.float32)
    d_slab[DO_AHAT:DO_AHAT + N, :N] = a_hat
    d_slab[DO_A2:DO_A2 + N, :N] = A2
    d_slab[DO_SDST:DO_SDST + N, :E] = s_dst
    d_slab[DO_POOL:DO_POOL + n_graphs, :N] = pool

    xe_slab = np.zeros((XE_ROWS, DVE), np.float32)
    xe_slab[XO_X:XO_X + N, :d_v] = x_np
    xe_slab[XO_E:XO_E + E, :d_e] = eattr_full

    p_slab = np.zeros((P_ROWS, DH), np.float32)
    p_slab[PO_WG:PO_WG + d_v, :d_h] = wg
    p_slab[PO_BG:PO_BG + NP, :d_h] = np.tile(bg, (NP, 1))
    p_slab[PO_WL1:PO_WL1 + d_h, :d_h] = wl1
    p_slab[PO_WE:PO_WE + d_e, :d_h] = w_e_eff
    p_slab[PO_BN:PO_BN + N, :d_h] = b_node
    p_slab[PO_WO:PO_WO + d_h, :output_dim] = wo
    p_slab[PO_BO:PO_BO + GP, :output_dim] = np.tile(bo, (GP, 1))

    d_slab = jnp.asarray(d_slab, dtype=jnp.bfloat16)
    xe_slab = jnp.asarray(xe_slab, dtype=jnp.bfloat16)
    p_slab = jnp.asarray(p_slab, dtype=jnp.bfloat16)

    # ---- run kernel -----------------------------------------------------------
    out = graph_encoder_pallas(d_slab, xe_slab, p_slab, n_graphs, output_dim)
    out = np.asarray(jax.block_until_ready(out))
    assert out.shape == (n_graphs, output_dim)

    # ---- matched-precision reference (same fused math / bf16 operands) --------
    ref_match = _forward_math(
        d_slab[DO_AHAT:DO_AHAT + NP], d_slab[DO_A2:DO_A2 + NP],
        d_slab[DO_SDST:DO_SDST + NP], d_slab[DO_POOL:DO_POOL + GP],
        xe_slab[XO_X:XO_X + NP], xe_slab[XO_E:XO_E + EP],
        p_slab[PO_WG:PO_WG + DVE], p_slab[PO_BG:PO_BG + NP],
        p_slab[PO_WL1:PO_WL1 + DH], p_slab[PO_WE:PO_WE + DVE],
        p_slab[PO_BN:PO_BN + NP], p_slab[PO_WO:PO_WO + DH],
        p_slab[PO_BO:PO_BO + GP])
    ref_match = np.asarray(ref_match)[:n_graphs, :output_dim]

    # ---- original (unfused, unpadded) float32 reference — module semantics ----
    x1 = np.maximum(a_hat @ (x_np @ wg) + bg, 0.0)
    xj = g_src @ x1
    ef = eattr_full @ we + be
    msg = xj @ wl1 + ef @ wl2 + bl
    x2 = np.maximum(s_dst @ msg, 0.0)
    ref_f32 = (pool @ x2) @ wo + bo

    assert np.allclose(out, ref_match, atol=2e-3, rtol=2e-3), \
        f"matched-ref max diff {np.abs(out - ref_match).max()}"
    assert np.allclose(out, ref_f32, atol=6e-2, rtol=6e-2), \
        f"f32-ref max diff {np.abs(out - ref_f32).max()}"
    print("KERNEL_OK")
</pallas_src>

<mosaic_0001>
module attributes {stable_mosaic.version = 11 : i64} {
  func.func @graph_encoder_kernel(%arg0: memref<400x128xbf16, #tpu.memory_space<vmem>>, %arg1: memref<256x16xbf16, #tpu.memory_space<vmem>>, %arg2: memref<560x128xbf16, #tpu.memory_space<vmem>>, %arg3: memref<16x128xf32, #tpu.memory_space<vmem>>) attributes {dimension_semantics = [], scalar_prefetch = 0 : i64, scratch_operands = 0 : i64, tpu.core_type = #tpu.core_type<tc>} {
    %c0 = arith.constant 0 : index
    %c0_0 = arith.constant 0 : index
    %0 = vector.load %arg0[%c0, %c0_0] : memref<400x128xbf16, #tpu.memory_space<vmem>>, vector<128x128xbf16>
    %c128 = arith.constant 128 : index
    %c0_1 = arith.constant 0 : index
    %1 = vector.load %arg0[%c128, %c0_1] : memref<400x128xbf16, #tpu.memory_space<vmem>>, vector<128x128xbf16>
    %c256 = arith.constant 256 : index
    %c0_2 = arith.constant 0 : index
    %2 = vector.load %arg0[%c256, %c0_2] : memref<400x128xbf16, #tpu.memory_space<vmem>>, vector<128x128xbf16>
    %c384 = arith.constant 384 : index
    %c0_3 = arith.constant 0 : index
    %3 = vector.load %arg0[%c384, %c0_3] : memref<400x128xbf16, #tpu.memory_space<vmem>>, vector<16x128xbf16>
    %c0_4 = arith.constant 0 : index
    %c0_5 = arith.constant 0 : index
    %4 = vector.load %arg1[%c0_4, %c0_5] : memref<256x16xbf16, #tpu.memory_space<vmem>>, vector<128x16xbf16>
    %c128_6 = arith.constant 128 : index
    %c0_7 = arith.constant 0 : index
    %5 = vector.load %arg1[%c128_6, %c0_7] : memref<256x16xbf16, #tpu.memory_space<vmem>>, vector<128x16xbf16>
    %c0_8 = arith.constant 0 : index
    %c0_9 = arith.constant 0 : index
    %6 = vector.load %arg2[%c0_8, %c0_9] : memref<560x128xbf16, #tpu.memory_space<vmem>>, vector<16x128xbf16>
    %c16 = arith.constant 16 : index
    %c0_10 = arith.constant 0 : index
    %7 = vector.load %arg2[%c16, %c0_10] : memref<560x128xbf16, #tpu.memory_space<vmem>>, vector<128x128xbf16>
    %c144 = arith.constant 144 : index
    %c0_11 = arith.constant 0 : index
    %8 = vector.load %arg2[%c144, %c0_11] : memref<560x128xbf16, #tpu.memory_space<vmem>>, vector<128x128xbf16>
    %c272 = arith.constant 272 : index
    %c0_12 = arith.constant 0 : index
    %9 = vector.load %arg2[%c272, %c0_12] : memref<560x128xbf16, #tpu.memory_space<vmem>>, vector<16x128xbf16>
    %c288 = arith.constant 288 : index
    %c0_13 = arith.constant 0 : index
    %10 = vector.load %arg2[%c288, %c0_13] : memref<560x128xbf16, #tpu.memory_space<vmem>>, vector<128x128xbf16>
    %c416 = arith.constant 416 : index
    %c0_14 = arith.constant 0 : index
    %11 = vector.load %arg2[%c416, %c0_14] : memref<560x128xbf16, #tpu.memory_space<vmem>>, vector<128x128xbf16>
    %c544 = arith.constant 544 : index
    %c0_15 = arith.constant 0 : index
    %12 = vector.load %arg2[%c544, %c0_15] : memref<560x128xbf16, #tpu.memory_space<vmem>>, vector<16x128xbf16>
    %cst = arith.constant dense<0.000000e+00> : vector<128x16xf32>
    %13 = tpu.matmul %0, %4, %cst {dimension_numbers = #tpu.dot_dimension_numbers<[1], [0], [0], [1], [0, 0, 1, 1], [], []>} : vector<128x128xbf16>, vector<128x16xbf16>, vector<128x16xf32> -> vector<128x16xf32>
    %14 = arith.truncf %13 : vector<128x16xf32> to vector<128x16xbf16>
    %cst_16 = arith.constant dense<0.000000e+00> : vector<128x128xf32>
    %15 = tpu.matmul %14, %6, %cst_16 {dimension_numbers = #tpu.dot_dimension_numbers<[1], [0], [0], [1], [0, 0, 1, 1], [], []>} : vector<128x16xbf16>, vector<16x128xbf16>, vector<128x128xf32> -> vector<128x128xf32>
    %16 = arith.extf %7 : vector<128x128xbf16> to vector<128x128xf32>
    %17 = arith.addf %15, %16 : vector<128x128xf32>
    %cst_17 = arith.constant 0.000000e+00 : f32
    %18 = vector.broadcast %cst_17 : f32 to vector<128x128xf32>
    %19 = arith.maximumf %17, %18 : vector<128x128xf32>
    %20 = arith.truncf %19 : vector<128x128xf32> to vector<128x128xbf16>
    %cst_18 = arith.constant dense<0.000000e+00> : vector<128x128xf32>
    %21 = tpu.matmul %20, %8, %cst_18 {dimension_numbers = #tpu.dot_dimension_numbers<[1], [0], [0], [1], [0, 0, 1, 1], [], []>} : vector<128x128xbf16>, vector<128x128xbf16>, vector<128x128xf32> -> vector<128x128xf32>
    %22 = arith.truncf %21 : vector<128x128xf32> to vector<128x128xbf16>
    %cst_19 = arith.constant dense<0.000000e+00> : vector<128x128xf32>
    %23 = tpu.matmul %1, %22, %cst_19 {dimension_numbers = #tpu.dot_dimension_numbers<[1], [0], [0], [1], [0, 0, 1, 1], [], []>} : vector<128x128xbf16>, vector<128x128xbf16>, vector<128x128xf32> -> vector<128x128xf32>
    %cst_20 = arith.constant dense<0.000000e+00> : vector<128x16xf32>
    %24 = tpu.matmul %2, %5, %cst_20 {dimension_numbers = #tpu.dot_dimension_numbers<[1], [0], [0], [1], [0, 0, 1, 1], [], []>} : vector<128x128xbf16>, vector<128x16xbf16>, vector<128x16xf32> -> vector<128x16xf32>
    %25 = arith.truncf %24 : vector<128x16xf32> to vector<128x16xbf16>
    %cst_21 = arith.constant dense<0.000000e+00> : vector<128x128xf32>
    %26 = tpu.matmul %25, %9, %cst_21 {dimension_numbers = #tpu.dot_dimension_numbers<[1], [0], [0], [1], [0, 0, 1, 1], [], []>} : vector<128x16xbf16>, vector<16x128xbf16>, vector<128x128xf32> -> vector<128x128xf32>
    %27 = arith.addf %23, %26 : vector<128x128xf32>
    %28 = arith.extf %10 : vector<128x128xbf16> to vector<128x128xf32>
    %29 = arith.addf %27, %28 : vector<128x128xf32>
    %cst_22 = arith.constant 0.000000e+00 : f32
    %30 = vector.broadcast %cst_22 : f32 to vector<128x128xf32>
    %31 = arith.maximumf %29, %30 : vector<128x128xf32>
    %32 = arith.truncf %31 : vector<128x128xf32> to vector<128x128xbf16>
    %cst_23 = arith.constant dense<0.000000e+00> : vector<16x128xf32>
    %33 = tpu.matmul %3, %32, %cst_23 {dimension_numbers = #tpu.dot_dimension_numbers<[1], [0], [0], [1], [0, 0, 1, 1], [], []>} : vector<16x128xbf16>, vector<128x128xbf16>, vector<16x128xf32> -> vector<16x128xf32>
    %34 = arith.truncf %33 : vector<16x128xf32> to vector<16x128xbf16>
    %cst_24 = arith.constant dense<0.000000e+00> : vector<16x128xf32>
    %35 = tpu.matmul %34, %11, %cst_24 {dimension_numbers = #tpu.dot_dimension_numbers<[1], [0], [0], [1], [0, 0, 1, 1], [], []>} : vector<16x128xbf16>, vector<128x128xbf16>, vector<16x128xf32> -> vector<16x128xf32>
    %36 = arith.extf %12 : vector<16x128xbf16> to vector<16x128xf32>
    %37 = arith.addf %35, %36 : vector<16x128xf32>
    %c0_25 = arith.constant 0 : index
    %c0_26 = arith.constant 0 : index
    %38 = vector.load %arg3[%c0_25, %c0_26] : memref<16x128xf32, #tpu.memory_space<vmem>>, vector<16x128xf32>
    tpu.vector_store %arg3[%c0_25, %c0_26], %37 {strides = array<i32>} : memref<16x128xf32, #tpu.memory_space<vmem>>, vector<16x128xf32>,
    return
  }
}

</mosaic_0001>

<llo_original>
// kernel: tpu_custom_call.1
$region0: #{tpu_custom_call.1}
  #allocation0 [shape = 'u32[]', space=smem, size = 0x4, offset = 0x4, fixed_abs, tag = 'smem constant byte address 0x4 - core index']
  #allocation1 [shape = 'u32[72,128]{1,0:T(1,128)}', space=vmem, size = 0x9000, scoped, tag = 'internal scratch']
  %s0 = inlined_call_operand.hbm [shape: bf16[400,128], index: 0, kind: input, shape index: {}]
  %s1 = inlined_call_operand.vmem [shape: bf16[256,16], index: 1, kind: input, shape index: {}]
  %s2 = inlined_call_operand.hbm [shape: bf16[560,128], index: 2, kind: input, shape index: {}]
  %s3 = inlined_call_operand.hbm [shape: f32[16,128], index: 3, kind: output, shape index: {}]
  %s4 = sld [smem:[#allocation0]]
  $region30: #{tpu_custom_call.1} parent=0
    _
  %s6 = ssub.s32 1, %s4
  %s7 = scalar_select 0, %s6, %s4
  $region1: #{tpu_custom_call.1} parent=0
    #allocation2 [shape = 'u8[102400]{0}', space=vmem, size = 0x19000, scoped, tag = 'input window, operand 0, single buffered']
    #allocation3 [shape = 's32[1]{0}', space=sflag, size = 0x4, scoped, tag = 'scoped memory for tpu_custom_call.1']
    #allocation4 [shape = 's32[1]{0}', space=sflag, size = 0x4, scoped, tag = 'scoped memory for tpu_custom_call.1']
    #allocation5 [shape = 'u8[143360]{0}', space=vmem, size = 0x23000, scoped, tag = 'input window, operand 2, single buffered']
    #allocation6 [shape = 's32[1]{0}', space=sflag, size = 0x4, scoped, tag = 'scoped memory for tpu_custom_call.1']
    #allocation7 [shape = 'u8[8192]{0}', space=vmem, size = 0x2000, scoped, tag = 'output window, operand 0, single buffered']
    %8 = vsyncpa [#allocation3], 0
    %9 = vsyncpa [#allocation6], 0
    %10 = vsyncpa [#allocation4], 0
    // Predicated region
    $region2: #{tpu_custom_call.1} parent=1 // pred_check
      _
    $region3: #{tpu_custom_call.1} parent=1 // pred_check_branch
      %12 = sbr.rel (0) target = $region5
    $region4: #{tpu_custom_call.1} parent=1 // pred_region
      %14 = vsyncadd [#allocation3], 0
      %s15 = sshll.u32 %s0, 4
      %s16 = int_to_ptr.hbm [resolvable:$true] %s15
      %s17 = sshll.u32 [#allocation2], 4
      %s18 = int_to_ptr.vmem [resolvable:$true] %s17
      %23 = dma.hbm_to_vmem [thread:$0]  %s16, 3200, %s18, [#allocation3], 64, 64, 4
    $region5: #{tpu_custom_call.1} parent=1 // pred_fallthru
      _
    // Predicated region
    $region6: #{tpu_custom_call.1} parent=1 // pred_check
      _
    $region7: #{tpu_custom_call.1} parent=1 // pred_check_branch
      %25 = sbr.rel (0) target = $region9
    $region8: #{tpu_custom_call.1} parent=1 // pred_region
      _
    $region9: #{tpu_custom_call.1} parent=1 // pred_fallthru
      _
    // Predicated region
    $region10: #{tpu_custom_call.1} parent=1 // pred_check
      _
    $region11: #{tpu_custom_call.1} parent=1 // pred_check_branch
      %27 = sbr.rel (0) target = $region13
    $region12: #{tpu_custom_call.1} parent=1 // pred_region
      %29 = vsyncadd [#allocation6], 0
      %s30 = sshll.u32 %s2, 4
      %s31 = int_to_ptr.hbm [resolvable:$true] %s30
      %s32 = sshll.u32 [#allocation5], 4
      %s33 = int_to_ptr.vmem [resolvable:$true] %s32
      %38 = dma.hbm_to_vmem [thread:$0]  %s31, 4480, %s33, [#allocation6], 64, 64, 4
    $region13: #{tpu_custom_call.1} parent=1 // pred_fallthru
      _
    // Predicated region
    $region14: #{tpu_custom_call.1} parent=1 // pred_check
      _
    $region15: #{tpu_custom_call.1} parent=1 // pred_check_branch
      %40 = sbr.rel (0) target = $region17
    $region16: #{tpu_custom_call.1} parent=1 // pred_region
      %42 = dma.done [#allocation3], 3200
    $region17: #{tpu_custom_call.1} parent=1 // pred_fallthru
      _
    // Predicated region
    $region18: #{tpu_custom_call.1} parent=1 // pred_check
      _
    $region19: #{tpu_custom_call.1} parent=1 // pred_check_branch
      %44 = sbr.rel (0) target = $region21
    $region20: #{tpu_custom_call.1} parent=1 // pred_region
      %46 = dma.done [#allocation6], 4480
    $region21: #{tpu_custom_call.1} parent=1 // pred_fallthru
      _
    %v48 = vld [vmem:[#allocation2] sm:$0xf]
    %v49 = vld [vmem:[#allocation2 + $0x4] sm:$0xf]
    %v50 = vld [vmem:[#allocation2 + $0x8] sm:$0xf]
    %v51 = vld [vmem:[#allocation2 + $0xc] sm:$0xf]
    %v52 = vld [vmem:[#allocation2 + $0x10] sm:$0xf]
    %v53 = vld [vmem:[#allocation2 + $0x14] sm:$0xf]
    %v54 = vld [vmem:[#allocation2 + $0x18] sm:$0xf]
    %v55 = vld [vmem:[#allocation2 + $0x1c] sm:$0xf]
    %v56 = vld [vmem:[#allocation2 + $0x20] sm:$0xf]
    %v57 = vld [vmem:[#allocation2 + $0x24] sm:$0xf]
    %v58 = vld [vmem:[#allocation2 + $0x28] sm:$0xf]
    %v59 = vld [vmem:[#allocation2 + $0x2c] sm:$0xf]
    %v60 = vld [vmem:[#allocation2 + $0x30] sm:$0xf]
    %v61 = vld [vmem:[#allocation2 + $0x34] sm:$0xf]
    %v62 = vld [vmem:[#allocation2 + $0x38] sm:$0xf]
    %v63 = vld [vmem:[#allocation2 + $0x3c] sm:$0xf]
    %v64 = vld [vmem:[#allocation2 + $0x40] sm:$0xf]
    %v65 = vld [vmem:[#allocation2 + $0x44] sm:$0xf]
    %v66 = vld [vmem:[#allocation2 + $0x48] sm:$0xf]
    %v67 = vld [vmem:[#allocation2 + $0x4c] sm:$0xf]
    %v68 = vld [vmem:[#allocation2 + $0x50] sm:$0xf]
    %v69 = vld [vmem:[#allocation2 + $0x54] sm:$0xf]
    %v70 = vld [vmem:[#allocation2 + $0x58] sm:$0xf]
    %v71 = vld [vmem:[#allocation2 + $0x5c] sm:$0xf]
    %v72 = vld [vmem:[#allocation2 + $0x60] sm:$0xf]
    %v73 = vld [vmem:[#allocation2 + $0x64] sm:$0xf]
    %v74 = vld [vmem:[#allocation2 + $0x68] sm:$0xf]
    %v75 = vld [vmem:[#allocation2 + $0x6c] sm:$0xf]
    %v76 = vld [vmem:[#allocation2 + $0x70] sm:$0xf]
    %v77 = vld [vmem:[#allocation2 + $0x74] sm:$0xf]
    %v78 = vld [vmem:[#allocation2 + $0x78] sm:$0xf]
    %v79 = vld [vmem:[#allocation2 + $0x7c] sm:$0xf]
    %v80 = vld [vmem:[#allocation2 + $0x80] sm:$0xf]
    %v81 = vld [vmem:[#allocation2 + $0x84] sm:$0xf]
    %v82 = vld [vmem:[#allocation2 + $0x88] sm:$0xf]
    %v83 = vld [vmem:[#allocation2 + $0x8c] sm:$0xf]
    %v84 = vld [vmem:[#allocation2 + $0x90] sm:$0xf]
    %v85 = vld [vmem:[#allocation2 + $0x94] sm:$0xf]
    %v86 = vld [vmem:[#allocation2 + $0x98] sm:$0xf]
    %v87 = vld [vmem:[#allocation2 + $0x9c] sm:$0xf]
    %v88 = vld [vmem:[#allocation2 + $0xa0] sm:$0xf]
    %v89 = vld [vmem:[#allocation2 + $0xa4] sm:$0xf]
    %v90 = vld [vmem:[#allocation2 + $0xa8] sm:$0xf]
    %v91 = vld [vmem:[#allocation2 + $0xac] sm:$0xf]
    %v92 = vld [vmem:[#allocation2 + $0xb0] sm:$0xf]
    %v93 = vld [vmem:[#allocation2 + $0xb4] sm:$0xf]
    %v94 = vld [vmem:[#allocation2 + $0xb8] sm:$0xf]
    %v95 = vld [vmem:[#allocation2 + $0xbc] sm:$0xf]
    %v96 = vld [vmem:[#allocation2 + $0xc0] sm:$0xf]
    %v97 = vld [vmem:[#allocation2 + $0xc4] sm:$0xf]
    %v98 = vld [vmem:[%s1] sm:$0xf]
    %v99 = vld [vmem:[%s1 + $0x4] sm:$0xf]
    %v100 = vld [vmem:[%s1 + $0x8] sm:$0xf]
    %v101 = vld [vmem:[%s1 + $0xc] sm:$0xf]
    %v102 = vld [vmem:[%s1 + $0x10] sm:$0xf]
    %v103 = vld [vmem:[%s1 + $0x14] sm:$0xf]
    %v104 = vld [vmem:[%s1 + $0x18] sm:$0xf]
    %v105 = vld [vmem:[%s1 + $0x1c] sm:$0xf]
    %v106 = vld [vmem:[%s1 + $0x20] sm:$0xf]
    %v107 = vld [vmem:[%s1 + $0x24] sm:$0xf]
    %v108 = vld [vmem:[%s1 + $0x28] sm:$0xf]
    %v109 = vld [vmem:[%s1 + $0x2c] sm:$0xf]
    %v110 = vld [vmem:[%s1 + $0x30] sm:$0xf]
    %v111 = vld [vmem:[%s1 + $0x34] sm:$0xf]
    %v112 = vld [vmem:[%s1 + $0x38] sm:$0xf]
    %v113 = vld [vmem:[%s1 + $0x3c] sm:$0xf]
    %v114 = vld [vmem:[%s1 + $0x40] sm:$0xf]
    %v115 = vld [vmem:[%s1 + $0x44] sm:$0xf]
    %v116 = vld [vmem:[%s1 + $0x48] sm:$0xf]
    %v117 = vld [vmem:[%s1 + $0x4c] sm:$0xf]
    %v118 = vld [vmem:[%s1 + $0x50] sm:$0xf]
    %v119 = vld [vmem:[%s1 + $0x54] sm:$0xf]
    %v120 = vld [vmem:[%s1 + $0x58] sm:$0xf]
    %v121 = vld [vmem:[%s1 + $0x5c] sm:$0xf]
    %v122 = vld [vmem:[%s1 + $0x60] sm:$0xf]
    %v123 = vld [vmem:[%s1 + $0x64] sm:$0xf]
    %v124 = vld [vmem:[%s1 + $0x68] sm:$0xf]
    %v125 = vld [vmem:[%s1 + $0x6c] sm:$0xf]
    %v126 = vld [vmem:[%s1 + $0x70] sm:$0xf]
    %v127 = vld [vmem:[%s1 + $0x74] sm:$0xf]
    %v128 = vld [vmem:[%s1 + $0x78] sm:$0xf]
    %v129 = vld [vmem:[%s1 + $0x7c] sm:$0xf]
    %v130 = vld [vmem:[#allocation5] sm:$0xf]
    %v131 = vld [vmem:[#allocation5 + $0x4] sm:$0xf]
    %v132 = vld [vmem:[#allocation5 + $0x8] sm:$0xf]
    %v133 = vld [vmem:[#allocation5 + $0xc] sm:$0xf]
    %v134 = vld [vmem:[#allocation5 + $0x10] sm:$0xf]
    %v135 = vld [vmem:[#allocation5 + $0x14] sm:$0xf]
    %v136 = vld [vmem:[#allocation5 + $0x18] sm:$0xf]
    %v137 = vld [vmem:[#allocation5 + $0x1c] sm:$0xf]
    %v138 = vld [vmem:[#allocation5 + $0x20] sm:$0xf]
    %v139 = vld [vmem:[#allocation5 + $0x24] sm:$0xf]
    %v140 = vld [vmem:[#allocation5 + $0x28] sm:$0xf]
    %v141 = vld [vmem:[#allocation5 + $0x2c] sm:$0xf]
    %v142 = vld [vmem:[#allocation5 + $0x30] sm:$0xf]
    %v143 = vld [vmem:[#allocation5 + $0x34] sm:$0xf]
    %v144 = vld [vmem:[#allocation5 + $0x38] sm:$0xf]
    %v145 = vld [vmem:[#allocation5 + $0x3c] sm:$0xf]
    %v146 = vld [vmem:[#allocation5 + $0x40] sm:$0xf]
    %v147 = vld [vmem:[#allocation5 + $0x44] sm:$0xf]
    %v148 = vld [vmem:[#allocation5 + $0x48] sm:$0xf]
    %v149 = vld [vmem:[#allocation5 + $0x4c] sm:$0xf]
    %v150 = vld [vmem:[#allocation5 + $0x50] sm:$0xf]
    %v151 = vld [vmem:[#allocation5 + $0x54] sm:$0xf]
    %v152 = vld [vmem:[#allocation5 + $0x58] sm:$0xf]
    %v153 = vld [vmem:[#allocation5 + $0x5c] sm:$0xf]
    %v154 = vld [vmem:[#allocation5 + $0x60] sm:$0xf]
    %v155 = vld [vmem:[#allocation5 + $0x64] sm:$0xf]
    %v156 = vld [vmem:[#allocation5 + $0x68] sm:$0xf]
    %v157 = vld [vmem:[#allocation5 + $0x6c] sm:$0xf]
    %v158 = vld [vmem:[#allocation5 + $0x70] sm:$0xf]
    %v159 = vld [vmem:[#allocation5 + $0x74] sm:$0xf]
    %v160 = vld [vmem:[#allocation5 + $0x78] sm:$0xf]
    %v161 = vld [vmem:[#allocation5 + $0x7c] sm:$0xf]
    %v162 = vld [vmem:[#allocation5 + $0x80] sm:$0xf]
    %v163 = vld [vmem:[#allocation5 + $0x84] sm:$0xf]
    %v164 = vld [vmem:[#allocation5 + $0x88] sm:$0xf]
    %v165 = vld [vmem:[#allocation5 + $0x8c] sm:$0xf]
    %v166 = vld [vmem:[#allocation5 + $0x90] sm:$0xf]
    %v167 = vld [vmem:[#allocation5 + $0x94] sm:$0xf]
    %v168 = vld [vmem:[#allocation5 + $0x98] sm:$0xf]
    %v169 = vld [vmem:[#allocation5 + $0x9c] sm:$0xf]
    %v170 = vld [vmem:[#allocation5 + $0xa0] sm:$0xf]
    %v171 = vld [vmem:[#allocation5 + $0xa4] sm:$0xf]
    %v172 = vld [vmem:[#allocation5 + $0xa8] sm:$0xf]
    %v173 = vld [vmem:[#allocation5 + $0xac] sm:$0xf]
    %v174 = vld [vmem:[#allocation5 + $0xb0] sm:$0xf]
    %v175 = vld [vmem:[#allocation5 + $0xb4] sm:$0xf]
    %v176 = vld [vmem:[#allocation5 + $0xb8] sm:$0xf]
    %v177 = vld [vmem:[#allocation5 + $0xbc] sm:$0xf]
    %v178 = vld [vmem:[#allocation5 + $0xc0] sm:$0xf]
    %v179 = vld [vmem:[#allocation5 + $0xc4] sm:$0xf]
    %v180 = vld [vmem:[#allocation5 + $0xc8] sm:$0xf]
    %v181 = vld [vmem:[#allocation5 + $0xcc] sm:$0xf]
    %v182 = vld [vmem:[#allocation5 + $0xd0] sm:$0xf]
    %v183 = vld [vmem:[#allocation5 + $0xd4] sm:$0xf]
    %v184 = vld [vmem:[#allocation5 + $0xd8] sm:$0xf]
    %v185 = vld [vmem:[#allocation5 + $0xdc] sm:$0xf]
    %v186 = vld [vmem:[#allocation5 + $0xe0] sm:$0xf]
    %v187 = vld [vmem:[#allocation5 + $0xe4] sm:$0xf]
    %v188 = vld [vmem:[#allocation5 + $0xe8] sm:$0xf]
    %v189 = vld [vmem:[#allocation5 + $0xec] sm:$0xf]
    %v190 = vld [vmem:[#allocation5 + $0xf0] sm:$0xf]
    %v191 = vld [vmem:[#allocation5 + $0xf4] sm:$0xf]
    %v192 = vld [vmem:[#allocation5 + $0xf8] sm:$0xf]
    %v193 = vld [vmem:[#allocation5 + $0xfc] sm:$0xf]
    %v194 = vld [vmem:[#allocation5 + $0x100] sm:$0xf]
    %v195 = vld [vmem:[#allocation5 + $0x104] sm:$0xf]
    %v196 = vld [vmem:[#allocation5 + $0x108] sm:$0xf]
    %v197 = vld [vmem:[#allocation5 + $0x10c] sm:$0xf]
    %v198 = vld [vmem:[#allocation5 + $0x110] sm:$0xf]
    %v199 = vld [vmem:[#allocation5 + $0x114] sm:$0xf]
    %v216 = vunpack.c.l.b16 %v48
    %v217 = vunpack.c.l.b16 %v49
    %v218 = vunpack.c.l.b16 %v50
    %v219 = vunpack.c.l.b16 %v51
    %v220 = vunpack.c.l.b16 %v52
    %v221 = vunpack.c.l.b16 %v53
    %v222 = vunpack.c.l.b16 %v54
    %v223 = vunpack.c.l.b16 %v55
    %v224 = vunpack.c.l.b16 %v56
    %v225 = vunpack.c.l.b16 %v57
    %v226 = vunpack.c.l.b16 %v58
    %v227 = vunpack.c.l.b16 %v59
    %v228 = vunpack.c.l.b16 %v60
    %v229 = vunpack.c.l.b16 %v61
    %v230 = vunpack.c.l.b16 %v62
    %v231 = vunpack.c.l.b16 %v63
    %v232 = vpack.c.b16 %v217, %v216
    %v233 = vpack.c.b16 %v219, %v218
    %v234 = vpack.c.b16 %v221, %v220
    %v235 = vpack.c.b16 %v223, %v222
    %v236 = vpack.c.b16 %v225, %v224
    %v237 = vpack.c.b16 %v227, %v226
    %v238 = vpack.c.b16 %v229, %v228
    %v239 = vpack.c.b16 %v231, %v230
    %v264 = vunpack.c.l.b16 %v98
    %v265 = vunpack.c.l.b16 %v99
    %v266 = vunpack.c.l.b16 %v100
    %v267 = vunpack.c.l.b16 %v101
    %v268 = vunpack.c.l.b16 %v102
    %v269 = vunpack.c.l.b16 %v103
    %v270 = vunpack.c.l.b16 %v104
    %v271 = vunpack.c.l.b16 %v105
    %v272 = vunpack.c.l.b16 %v106
    %v273 = vunpack.c.l.b16 %v107
    %v274 = vunpack.c.l.b16 %v108
    %v275 = vunpack.c.l.b16 %v109
    %v276 = vunpack.c.l.b16 %v110
    %v277 = vunpack.c.l.b16 %v111
    %v278 = vunpack.c.l.b16 %v112
    %v279 = vunpack.c.l.b16 %v113
    %v280 = vpack.c.b16 %v265, %v264
    %v281 = vpack.c.b16 %v267, %v266
    %v282 = vpack.c.b16 %v269, %v268
    %v283 = vpack.c.b16 %v271, %v270
    %v284 = vpack.c.b16 %v273, %v272
    %v285 = vpack.c.b16 %v275, %v274
    %v286 = vpack.c.b16 %v277, %v276
    %v287 = vpack.c.b16 %v279, %v278
    %296 = vmatpush.bf16.msra.mxu0 %v287
    %297 = vmatpush.bf16.msra.mxu0 %v286
    %298 = vmatpush.bf16.msra.mxu0 %v285
    %299 = vmatpush.bf16.msra.mxu0 %v284
    %300 = vmatpush.bf16.msra.mxu0 %v283
    %301 = vmatpush.bf16.msra.mxu0 %v282
    %302 = vmatpush.bf16.msra.mxu0 %v281
    %303 = vmatpush.bf16.msra.mxu0 %v280
    %304 = vmatmul.bf16.gmra.mxu0 %v232
    %v305 = vpop.f32.mrf.mxu0
    %v306 = vadd.f32 0.0, %v305
    %v307 = vpop.f32.mrf.mxu0
    %v308 = vadd.f32 0.0, %v307
    %309 = vmatmul.bf16.gmra.mxu0 %v233
    %v310 = vpop.f32.mrf.mxu0
    %v311 = vadd.f32 0.0, %v310
    %v312 = vpop.f32.mrf.mxu0
    %v313 = vadd.f32 0.0, %v312
    %314 = vmatmul.bf16.gmra.mxu0 %v234
    %v315 = vpop.f32.mrf.mxu0
    %v316 = vadd.f32 0.0, %v315
    %v317 = vpop.f32.mrf.mxu0
    %v318 = vadd.f32 0.0, %v317
    %319 = vmatmul.bf16.gmra.mxu0 %v235
    %v320 = vpop.f32.mrf.mxu0
    %v321 = vadd.f32 0.0, %v320
    %v322 = vpop.f32.mrf.mxu0
    %v323 = vadd.f32 0.0, %v322
    %324 = vmatmul.bf16.gmra.mxu0 %v236
    %v325 = vpop.f32.mrf.mxu0
    %v326 = vadd.f32 0.0, %v325
    %v327 = vpop.f32.mrf.mxu0
    %v328 = vadd.f32 0.0, %v327
    %329 = vmatmul.bf16.gmra.mxu0 %v237
    %v330 = vpop.f32.mrf.mxu0
    %v331 = vadd.f32 0.0, %v330
    %v332 = vpop.f32.mrf.mxu0
    %v333 = vadd.f32 0.0, %v332
    %334 = vmatmul.bf16.gmra.mxu0 %v238
    %v335 = vpop.f32.mrf.mxu0
    %v336 = vadd.f32 0.0, %v335
    %v337 = vpop.f32.mrf.mxu0
    %v338 = vadd.f32 0.0, %v337
    %339 = vmatmul.bf16.gmra.mxu0 %v239
    %v340 = vpop.f32.mrf.mxu0
    %v341 = vadd.f32 0.0, %v340
    %v342 = vpop.f32.mrf.mxu0
    %v343 = vadd.f32 0.0, %v342
    %344 = vdwg.mxu0
    %v345 = vpack.c.bf16 %v308, %v306
    %v346 = vpack.c.bf16 %v313, %v311
    %v347 = vpack.c.bf16 %v318, %v316
    %v348 = vpack.c.bf16 %v323, %v321
    %v349 = vpack.c.bf16 %v328, %v326
    %v350 = vpack.c.bf16 %v333, %v331
    %v351 = vpack.c.bf16 %v338, %v336
    %v352 = vpack.c.bf16 %v343, %v341
    %v353 = vunpack.c.l.bf16 %v132
    %v354 = vunpack.c.l.bf16 %v133
    %v355 = vunpack.c.l.bf16 %v134
    %v356 = vunpack.c.l.bf16 %v135
    %v357 = vunpack.c.l.bf16 %v136
    %v358 = vunpack.c.l.bf16 %v137
    %v359 = vunpack.c.l.bf16 %v138
    %v360 = vunpack.c.l.bf16 %v139
    %v361 = vunpack.c.l.bf16 %v140
    %v362 = vunpack.c.l.bf16 %v141
    %v363 = vunpack.c.l.bf16 %v142
    %v364 = vunpack.c.l.bf16 %v143
    %v365 = vunpack.c.l.bf16 %v144
    %v366 = vunpack.c.l.bf16 %v145
    %v367 = vunpack.c.l.bf16 %v146
    %v368 = vunpack.c.l.bf16 %v147
    %v371 = vunpack.c.l.b16 %v130
    %v372 = vunpack.c.l.b16 %v131
    %v373 = vpack.c.b16 %v372, %v371
    %vm375 = vcmask 130048
    %v377 = vsel %vm375, %v345, 0
    %v380 = vsel %vm375, %v346, 0
    %v383 = vsel %vm375, %v347, 0
    %v386 = vsel %vm375, %v348, 0
    %v389 = vsel %vm375, %v349, 0
    %v392 = vsel %vm375, %v350, 0
    %v395 = vsel %vm375, %v351, 0
    %v398 = vsel %vm375, %v352, 0
    %400 = vmatpush.bf16.msra.mxu0 0
    %401 = vmatpush.bf16.msra.mxu0 0
    %402 = vmatpush.bf16.msra.mxu0 0
    %403 = vmatpush.bf16.msra.mxu0 0
    %404 = vmatpush.bf16.msra.mxu0 0
    %405 = vmatpush.bf16.msra.mxu0 0
    %406 = vmatpush.bf16.msra.mxu0 0
    %407 = vmatpush.bf16.msra.mxu0 %v373
    %408 = vmatmul.bf16.gmra.mxu0 %v377
    %v409 = vpop.f32.mrf.mxu0
    %v410 = vadd.f32 %v353, %v409
    %v411 = vpop.f32.mrf.mxu0
    %v412 = vadd.f32 %v354, %v411
    %413 = vmatmul.bf16.gmra.mxu0 %v380
    %v414 = vpop.f32.mrf.mxu0
    %v415 = vadd.f32 %v355, %v414
    %v416 = vpop.f32.mrf.mxu0
    %v417 = vadd.f32 %v356, %v416
    %418 = vmatmul.bf16.gmra.mxu0 %v383
    %v419 = vpop.f32.mrf.mxu0
    %v420 = vadd.f32 %v357, %v419
    %v421 = vpop.f32.mrf.mxu0
    %v422 = vadd.f32 %v358, %v421
    %423 = vmatmul.bf16.gmra.mxu0 %v386
    %v424 = vpop.f32.mrf.mxu0
    %v425 = vadd.f32 %v359, %v424
    %v426 = vpop.f32.mrf.mxu0
    %v427 = vadd.f32 %v360, %v426
    %428 = vmatmul.bf16.gmra.mxu0 %v389
    %v429 = vpop.f32.mrf.mxu0
    %v430 = vadd.f32 %v361, %v429
    %v431 = vpop.f32.mrf.mxu0
    %v432 = vadd.f32 %v362, %v431
    %433 = vmatmul.bf16.gmra.mxu0 %v392
    %v434 = vpop.f32.mrf.mxu0
    %v435 = vadd.f32 %v363, %v434
    %v436 = vpop.f32.mrf.mxu0
    %v437 = vadd.f32 %v364, %v436
    %438 = vmatmul.bf16.gmra.mxu0 %v395
    %v439 = vpop.f32.mrf.mxu0
    %v440 = vadd.f32 %v365, %v439
    %v441 = vpop.f32.mrf.mxu0
    %v442 = vadd.f32 %v366, %v441
    %443 = vmatmul.bf16.gmra.mxu0 %v398
    %v444 = vpop.f32.mrf.mxu0
    %v445 = vadd.f32 %v367, %v444
    %v446 = vpop.f32.mrf.mxu0
    %v447 = vadd.f32 %v368, %v446
    %448 = vdwg.mxu0
    %v449 = vmax.f32 %v410, 0.0
    %v450 = vmax.f32 %v412, 0.0
    %v451 = vmax.f32 %v415, 0.0
    %v452 = vmax.f32 %v417, 0.0
    %v453 = vmax.f32 %v420, 0.0
    %v454 = vmax.f32 %v422, 0.0
    %v455 = vmax.f32 %v425, 0.0
    %v456 = vmax.f32 %v427, 0.0
    %v457 = vmax.f32 %v430, 0.0
    %v458 = vmax.f32 %v432, 0.0
    %v459 = vmax.f32 %v435, 0.0
    %v460 = vmax.f32 %v437, 0.0
    %v461 = vmax.f32 %v440, 0.0
    %v462 = vmax.f32 %v442, 0.0
    %v463 = vmax.f32 %v445, 0.0
    %v464 = vmax.f32 %v447, 0.0
    %v465 = vpack.c.bf16 %v450, %v449
    %v466 = vpack.c.bf16 %v452, %v451
    %v467 = vpack.c.bf16 %v454, %v453
    %v468 = vpack.c.bf16 %v456, %v455
    %v469 = vpack.c.bf16 %v458, %v457
    %v470 = vpack.c.bf16 %v460, %v459
    %v471 = vpack.c.bf16 %v462, %v461
    %v472 = vpack.c.bf16 %v464, %v463
    %v489 = vunpack.c.l.b16 %v148
    %v490 = vunpack.c.l.b16 %v149
    %v491 = vunpack.c.l.b16 %v150
    %v492 = vunpack.c.l.b16 %v151
    %v493 = vunpack.c.l.b16 %v152
    %v494 = vunpack.c.l.b16 %v153
    %v495 = vunpack.c.l.b16 %v154
    %v496 = vunpack.c.l.b16 %v155
    %v497 = vunpack.c.l.b16 %v156
    %v498 = vunpack.c.l.b16 %v157
    %v499 = vunpack.c.l.b16 %v158
    %v500 = vunpack.c.l.b16 %v159
    %v501 = vunpack.c.l.b16 %v160
    %v502 = vunpack.c.l.b16 %v161
    %v503 = vunpack.c.l.b16 %v162
    %v504 = vunpack.c.l.b16 %v163
    %v505 = vpack.c.b16 %v490, %v489
    %v506 = vpack.c.b16 %v492, %v491
    %v507 = vpack.c.b16 %v494, %v493
    %v508 = vpack.c.b16 %v496, %v495
    %v509 = vpack.c.b16 %v498, %v497
    %v510 = vpack.c.b16 %v500, %v499
    %v511 = vpack.c.b16 %v502, %v501
    %v512 = vpack.c.b16 %v504, %v503
    %521 = vmatpush.bf16.msra.mxu0 %v512
    %522 = vmatpush.bf16.msra.mxu0 %v511
    %523 = vmatpush.bf16.msra.mxu0 %v510
    %524 = vmatpush.bf16.msra.mxu0 %v509
    %525 = vmatpush.bf16.msra.mxu0 %v508
    %526 = vmatpush.bf16.msra.mxu0 %v507
    %527 = vmatpush.bf16.msra.mxu0 %v506
    %528 = vmatpush.bf16.msra.mxu0 %v505
    %529 = vmatmul.bf16.gmra.mxu0 %v465
    %v530 = vpop.f32.mrf.mxu0
    %v531 = vadd.f32 0.0, %v530
    %v532 = vpop.f32.mrf.mxu0
    %v533 = vadd.f32 0.0, %v532
    %534 = vmatmul.bf16.gmra.mxu0 %v466
    %v535 = vpop.f32.mrf.mxu0
    %v536 = vadd.f32 0.0, %v535
    %v537 = vpop.f32.mrf.mxu0
    %v538 = vadd.f32 0.0, %v537
    %539 = vmatmul.bf16.gmra.mxu0 %v467
    %v540 = vpop.f32.mrf.mxu0
    %v541 = vadd.f32 0.0, %v540
    %v542 = vpop.f32.mrf.mxu0
    %v543 = vadd.f32 0.0, %v542
    %544 = vmatmul.bf16.gmra.mxu0 %v468
    %v545 = vpop.f32.mrf.mxu0
    %v546 = vadd.f32 0.0, %v545
    %v547 = vpop.f32.mrf.mxu0
    %v548 = vadd.f32 0.0, %v547
    %549 = vmatmul.bf16.gmra.mxu0 %v469
    %v550 = vpop.f32.mrf.mxu0
    %v551 = vadd.f32 0.0, %v550
    %v552 = vpop.f32.mrf.mxu0
    %v553 = vadd.f32 0.0, %v552
    %554 = vmatmul.bf16.gmra.mxu0 %v470
    %v555 = vpop.f32.mrf.mxu0
    %v556 = vadd.f32 0.0, %v555
    %v557 = vpop.f32.mrf.mxu0
    %v558 = vadd.f32 0.0, %v557
    %559 = vmatmul.bf16.gmra.mxu0 %v471
    %v560 = vpop.f32.mrf.mxu0
    %v561 = vadd.f32 0.0, %v560
    %v562 = vpop.f32.mrf.mxu0
    %v563 = vadd.f32 0.0, %v562
    %564 = vmatmul.bf16.gmra.mxu0 %v472
    %v565 = vpop.f32.mrf.mxu0
    %v566 = vadd.f32 0.0, %v565
    %v567 = vpop.f32.mrf.mxu0
    %v568 = vadd.f32 0.0, %v567
    %569 = vdwg.mxu0
    %v570 = vpack.c.bf16 %v533, %v531
    %v571 = vpack.c.bf16 %v538, %v536
    %v572 = vpack.c.bf16 %v543, %v541
    %v573 = vpack.c.bf16 %v548, %v546
    %v574 = vpack.c.bf16 %v553, %v551
    %v575 = vpack.c.bf16 %v558, %v556
    %v576 = vpack.c.bf16 %v563, %v561
    %v577 = vpack.c.bf16 %v568, %v566
    %v594 = vunpack.c.l.b16 %v80
    %v595 = vunpack.c.l.b16 %v81
    %v596 = vunpack.c.l.b16 %v82
    %v597 = vunpack.c.l.b16 %v83
    %v598 = vunpack.c.l.b16 %v84
    %v599 = vunpack.c.l.b16 %v85
    %v600 = vunpack.c.l.b16 %v86
    %v601 = vunpack.c.l.b16 %v87
    %v602 = vunpack.c.l.b16 %v88
    %v603 = vunpack.c.l.b16 %v89
    %v604 = vunpack.c.l.b16 %v90
    %v605 = vunpack.c.l.b16 %v91
    %v606 = vunpack.c.l.b16 %v92
    %v607 = vunpack.c.l.b16 %v93
    %v608 = vunpack.c.l.b16 %v94
    %v609 = vunpack.c.l.b16 %v95
    %v610 = vpack.c.b16 %v595, %v594
    %v611 = vpack.c.b16 %v597, %v596
    %v612 = vpack.c.b16 %v599, %v598
    %v613 = vpack.c.b16 %v601, %v600
    %v614 = vpack.c.b16 %v603, %v602
    %v615 = vpack.c.b16 %v605, %v604
    %v616 = vpack.c.b16 %v607, %v606
    %v617 = vpack.c.b16 %v609, %v608
    %v642 = vunpack.c.l.b16 %v114
    %v643 = vunpack.c.l.b16 %v115
    %v644 = vunpack.c.l.b16 %v116
    %v645 = vunpack.c.l.b16 %v117
    %v646 = vunpack.c.l.b16 %v118
    %v647 = vunpack.c.l.b16 %v119
    %v648 = vunpack.c.l.b16 %v120
    %v649 = vunpack.c.l.b16 %v121
    %v650 = vunpack.c.l.b16 %v122
    %v651 = vunpack.c.l.b16 %v123
    %v652 = vunpack.c.l.b16 %v124
    %v653 = vunpack.c.l.b16 %v125
    %v654 = vunpack.c.l.b16 %v126
    %v655 = vunpack.c.l.b16 %v127
    %v656 = vunpack.c.l.b16 %v128
    %v657 = vunpack.c.l.b16 %v129
    %v658 = vpack.c.b16 %v643, %v642
    %v659 = vpack.c.b16 %v645, %v644
    %v660 = vpack.c.b16 %v647, %v646
    %v661 = vpack.c.b16 %v649, %v648
    %v662 = vpack.c.b16 %v651, %v650
    %v663 = vpack.c.b16 %v653, %v652
    %v664 = vpack.c.b16 %v655, %v654
    %v665 = vpack.c.b16 %v657, %v656
    %674 = vmatpush.bf16.msra.mxu0 %v665
    %675 = vmatpush.bf16.msra.mxu0 %v664
    %676 = vmatpush.bf16.msra.mxu0 %v663
    %677 = vmatpush.bf16.msra.mxu0 %v662
    %678 = vmatpush.bf16.msra.mxu0 %v661
    %679 = vmatpush.bf16.msra.mxu0 %v660
    %680 = vmatpush.bf16.msra.mxu0 %v659
    %681 = vmatpush.bf16.msra.mxu0 %v658
    %682 = vmatmul.bf16.gmra.mxu0 %v610
    %v683 = vpop.f32.mrf.mxu0
    %v684 = vadd.f32 0.0, %v683
    %v685 = vpop.f32.mrf.mxu0
    %v686 = vadd.f32 0.0, %v685
    %687 = vmatmul.bf16.gmra.mxu0 %v611
    %v688 = vpop.f32.mrf.mxu0
    %v689 = vadd.f32 0.0, %v688
    %v690 = vpop.f32.mrf.mxu0
    %v691 = vadd.f32 0.0, %v690
    %692 = vmatmul.bf16.gmra.mxu0 %v612
    %v693 = vpop.f32.mrf.mxu0
    %v694 = vadd.f32 0.0, %v693
    %v695 = vpop.f32.mrf.mxu0
    %v696 = vadd.f32 0.0, %v695
    %697 = vmatmul.bf16.gmra.mxu0 %v613
    %v698 = vpop.f32.mrf.mxu0
    %v699 = vadd.f32 0.0, %v698
    %v700 = vpop.f32.mrf.mxu0
    %v701 = vadd.f32 0.0, %v700
    %702 = vmatmul.bf16.gmra.mxu0 %v614
    %v703 = vpop.f32.mrf.mxu0
    %v704 = vadd.f32 0.0, %v703
    %v705 = vpop.f32.mrf.mxu0
    %v706 = vadd.f32 0.0, %v705
    %707 = vmatmul.bf16.gmra.mxu0 %v615
    %v708 = vpop.f32.mrf.mxu0
    %v709 = vadd.f32 0.0, %v708
    %v710 = vpop.f32.mrf.mxu0
    %v711 = vadd.f32 0.0, %v710
    %712 = vmatmul.bf16.gmra.mxu0 %v616
    %v713 = vpop.f32.mrf.mxu0
    %v714 = vadd.f32 0.0, %v713
    %v715 = vpop.f32.mrf.mxu0
    %v716 = vadd.f32 0.0, %v715
    %717 = vmatmul.bf16.gmra.mxu0 %v617
    %v718 = vpop.f32.mrf.mxu0
    %v719 = vadd.f32 0.0, %v718
    %v720 = vpop.f32.mrf.mxu0
    %v721 = vadd.f32 0.0, %v720
    %722 = vdwg.mxu0
    %v723 = vpack.c.bf16 %v686, %v684
    %v724 = vpack.c.bf16 %v691, %v689
    %v725 = vpack.c.bf16 %v696, %v694
    %v726 = vpack.c.bf16 %v701, %v699
    %v727 = vpack.c.bf16 %v706, %v704
    %v728 = vpack.c.bf16 %v711, %v709
    %v729 = vpack.c.bf16 %v716, %v714
    %v730 = vpack.c.bf16 %v721, %v719
    %v733 = vunpack.c.l.b16 %v164
    %v734 = vunpack.c.l.b16 %v165
    %v735 = vpack.c.b16 %v734, %v733
    %v738 = vsel %vm375, %v723, 0
    %v741 = vsel %vm375, %v724, 0
    %v744 = vsel %vm375, %v725, 0
    %v747 = vsel %vm375, %v726, 0
    %v750 = vsel %vm375, %v727, 0
    %v753 = vsel %vm375, %v728, 0
    %v756 = vsel %vm375, %v729, 0
    %v759 = vsel %vm375, %v730, 0
    %761 = vmatpush.bf16.msra.mxu0 0
    %762 = vmatpush.bf16.msra.mxu0 0
    %763 = vmatpush.bf16.msra.mxu0 0
    %764 = vmatpush.bf16.msra.mxu0 0
    %765 = vmatpush.bf16.msra.mxu0 0
    %766 = vmatpush.bf16.msra.mxu0 0
    %767 = vmatpush.bf16.msra.mxu0 0
    %768 = vmatpush.bf16.msra.mxu0 %v735
    %769 = vmatmul.bf16.gmra.mxu0 %v738
    %v770 = vpop.f32.mrf.mxu0
    %v771 = vadd.f32 0.0, %v770
    %v772 = vpop.f32.mrf.mxu0
    %v773 = vadd.f32 0.0, %v772
    %774 = vmatmul.bf16.gmra.mxu0 %v741
    %v775 = vpop.f32.mrf.mxu0
    %v776 = vadd.f32 0.0, %v775
    %v777 = vpop.f32.mrf.mxu0
    %v778 = vadd.f32 0.0, %v777
    %779 = vmatmul.bf16.gmra.mxu0 %v744
    %v780 = vpop.f32.mrf.mxu0
    %v781 = vadd.f32 0.0, %v780
    %v782 = vpop.f32.mrf.mxu0
    %v783 = vadd.f32 0.0, %v782
    %784 = vmatmul.bf16.gmra.mxu0 %v747
    %v785 = vpop.f32.mrf.mxu0
    %v786 = vadd.f32 0.0, %v785
    %v787 = vpop.f32.mrf.mxu0
    %v788 = vadd.f32 0.0, %v787
    %789 = vmatmul.bf16.gmra.mxu0 %v750
    %v790 = vpop.f32.mrf.mxu0
    %v791 = vadd.f32 0.0, %v790
    %v792 = vpop.f32.mrf.mxu0
    %v793 = vadd.f32 0.0, %v792
    %794 = vmatmul.bf16.gmra.mxu0 %v753
    %v795 = vpop.f32.mrf.mxu0
    %v796 = vadd.f32 0.0, %v795
    %v797 = vpop.f32.mrf.mxu0
    %v798 = vadd.f32 0.0, %v797
    %799 = vmatmul.bf16.gmra.mxu0 %v756
    %v800 = vpop.f32.mrf.mxu0
    %v801 = vadd.f32 0.0, %v800
    %v802 = vpop.f32.mrf.mxu0
    %v803 = vadd.f32 0.0, %v802
    %804 = vmatmul.bf16.gmra.mxu0 %v759
    %v805 = vpop.f32.mrf.mxu0
    %v806 = vadd.f32 0.0, %v805
    %v807 = vpop.f32.mrf.mxu0
    %v808 = vadd.f32 0.0, %v807
    %809 = vdwg.mxu0
    %v826 = vunpack.c.l.b16 %v64
    %v827 = vunpack.c.l.b16 %v65
    %v828 = vunpack.c.l.b16 %v66
    %v829 = vunpack.c.l.b16 %v67
    %v830 = vunpack.c.l.b16 %v68
    %v831 = vunpack.c.l.b16 %v69
    %v832 = vunpack.c.l.b16 %v70
    %v833 = vunpack.c.l.b16 %v71
    %v834 = vunpack.c.l.b16 %v72
    %v835 = vunpack.c.l.b16 %v73
    %v836 = vunpack.c.l.b16 %v74
    %v837 = vunpack.c.l.b16 %v75
    %v838 = vunpack.c.l.b16 %v76
    %v839 = vunpack.c.l.b16 %v77
    %v840 = vunpack.c.l.b16 %v78
    %v841 = vunpack.c.l.b16 %v79
    %v842 = vpack.c.b16 %v827, %v826
    %v843 = vpack.c.b16 %v829, %v828
    %v844 = vpack.c.b16 %v831, %v830
    %v845 = vpack.c.b16 %v833, %v832
    %v846 = vpack.c.b16 %v835, %v834
    %v847 = vpack.c.b16 %v837, %v836
    %v848 = vpack.c.b16 %v839, %v838
    %v849 = vpack.c.b16 %v841, %v840
    %858 = vmatpush.bf16.msra.mxu0 %v577
    %859 = vmatpush.bf16.msra.mxu0 %v576
    %860 = vmatpush.bf16.msra.mxu0 %v575
    %861 = vmatpush.bf16.msra.mxu0 %v574
    %862 = vmatpush.bf16.msra.mxu0 %v573
    %863 = vmatpush.bf16.msra.mxu0 %v572
    %864 = vmatpush.bf16.msra.mxu0 %v571
    %865 = vmatpush.bf16.msra.mxu0 %v570
    %866 = vmatmul.bf16.gmra.mxu0 %v842
    %v867 = vpop.f32.mrf.mxu0
    %v868 = vadd.f32 %v771, %v867
    %v869 = vpop.f32.mrf.mxu0
    %v870 = vadd.f32 %v773, %v869
    %871 = vmatmul.bf16.gmra.mxu0 %v843
    %v872 = vpop.f32.mrf.mxu0
    %v873 = vadd.f32 %v776, %v872
    %v874 = vpop.f32.mrf.mxu0
    %v875 = vadd.f32 %v778, %v874
    %876 = vmatmul.bf16.gmra.mxu0 %v844
    %v877 = vpop.f32.mrf.mxu0
    %v878 = vadd.f32 %v781, %v877
    %v879 = vpop.f32.mrf.mxu0
    %v880 = vadd.f32 %v783, %v879
    %881 = vmatmul.bf16.gmra.mxu0 %v845
    %v882 = vpop.f32.mrf.mxu0
    %v883 = vadd.f32 %v786, %v882
    %v884 = vpop.f32.mrf.mxu0
    %v885 = vadd.f32 %v788, %v884
    %886 = vmatmul.bf16.gmra.mxu0 %v846
    %v887 = vpop.f32.mrf.mxu0
    %v888 = vadd.f32 %v791, %v887
    %v889 = vpop.f32.mrf.mxu0
    %v890 = vadd.f32 %v793, %v889
    %891 = vmatmul.bf16.gmra.mxu0 %v847
    %v892 = vpop.f32.mrf.mxu0
    %v893 = vadd.f32 %v796, %v892
    %v894 = vpop.f32.mrf.mxu0
    %v895 = vadd.f32 %v798, %v894
    %896 = vmatmul.bf16.gmra.mxu0 %v848
    %v897 = vpop.f32.mrf.mxu0
    %v898 = vadd.f32 %v801, %v897
    %v899 = vpop.f32.mrf.mxu0
    %v900 = vadd.f32 %v803, %v899
    %901 = vmatmul.bf16.gmra.mxu0 %v849
    %v902 = vpop.f32.mrf.mxu0
    %v903 = vadd.f32 %v806, %v902
    %v904 = vpop.f32.mrf.mxu0
    %v905 = vadd.f32 %v808, %v904
    %906 = vdwg.mxu0
    %v907 = vunpack.c.l.bf16 %v166
    %v908 = vunpack.c.l.bf16 %v167
    %v909 = vunpack.c.l.bf16 %v168
    %v910 = vunpack.c.l.bf16 %v169
    %v911 = vunpack.c.l.bf16 %v170
    %v912 = vunpack.c.l.bf16 %v171
    %v913 = vunpack.c.l.bf16 %v172
    %v914 = vunpack.c.l.bf16 %v173
    %v915 = vunpack.c.l.bf16 %v174
    %v916 = vunpack.c.l.bf16 %v175
    %v917 = vunpack.c.l.bf16 %v176
    %v918 = vunpack.c.l.bf16 %v177
    %v919 = vunpack.c.l.bf16 %v178
    %v920 = vunpack.c.l.bf16 %v179
    %v921 = vunpack.c.l.bf16 %v180
    %v922 = vunpack.c.l.bf16 %v181
    %v923 = vadd.f32 %v868, %v907
    %v924 = vadd.f32 %v870, %v908
    %v925 = vadd.f32 %v873, %v909
    %v926 = vadd.f32 %v875, %v910
    %v927 = vadd.f32 %v878, %v911
    %v928 = vadd.f32 %v880, %v912
    %v929 = vadd.f32 %v883, %v913
    %v930 = vadd.f32 %v885, %v914
    %v931 = vadd.f32 %v888, %v915
    %v932 = vadd.f32 %v890, %v916
    %v933 = vadd.f32 %v893, %v917
    %v934 = vadd.f32 %v895, %v918
    %v935 = vadd.f32 %v898, %v919
    %v936 = vadd.f32 %v900, %v920
    %v937 = vadd.f32 %v903, %v921
    %v938 = vadd.f32 %v905, %v922
    %v939 = vmax.f32 %v923, 0.0
    %v940 = vmax.f32 %v924, 0.0
    %v941 = vmax.f32 %v925, 0.0
    %v942 = vmax.f32 %v926, 0.0
    %v943 = vmax.f32 %v927, 0.0
    %v944 = vmax.f32 %v928, 0.0
    %v945 = vmax.f32 %v929, 0.0
    %v946 = vmax.f32 %v930, 0.0
    %v947 = vmax.f32 %v931, 0.0
    %v948 = vmax.f32 %v932, 0.0
    %v949 = vmax.f32 %v933, 0.0
    %v950 = vmax.f32 %v934, 0.0
    %v951 = vmax.f32 %v935, 0.0
    %v952 = vmax.f32 %v936, 0.0
    %v953 = vmax.f32 %v937, 0.0
    %v954 = vmax.f32 %v938, 0.0
    %v955 = vpack.c.bf16 %v940, %v939
    %v956 = vpack.c.bf16 %v942, %v941
    %v957 = vpack.c.bf16 %v944, %v943
    %v958 = vpack.c.bf16 %v946, %v945
    %v959 = vpack.c.bf16 %v948, %v947
    %v960 = vpack.c.bf16 %v950, %v949
    %v961 = vpack.c.bf16 %v952, %v951
    %v962 = vpack.c.bf16 %v954, %v953
    %v965 = vunpack.c.l.b16 %v96
    %v966 = vunpack.c.l.b16 %v97
    %v967 = vpack.c.b16 %v966, %v965
    %969 = vmatpush.bf16.msra.mxu0 %v962
    %970 = vmatpush.bf16.msra.mxu0 %v961
    %971 = vmatpush.bf16.msra.mxu0 %v960
    %972 = vmatpush.bf16.msra.mxu0 %v959
    %973 = vmatpush.bf16.msra.mxu0 %v958
    %974 = vmatpush.bf16.msra.mxu0 %v957
    %975 = vmatpush.bf16.msra.mxu0 %v956
    %976 = vmatpush.bf16.msra.mxu0 %v955
    %977 = vmatmul.bf16.gmra.mxu0 %v967
    %v978 = vpop.f32.mrf.mxu0
    %v979 = vadd.f32 0.0, %v978
    %v980 = vpop.f32.mrf.mxu0
    %v981 = vadd.f32 0.0, %v980
    %982 = vdwg.mxu0
    %v983 = vpack.c.bf16 %v981, %v979
    %v984 = vunpack.c.l.bf16 %v198
    %v985 = vunpack.c.l.bf16 %v199
    %v1002 = vunpack.c.l.b16 %v182
    %v1003 = vunpack.c.l.b16 %v183
    %v1004 = vunpack.c.l.b16 %v184
    %v1005 = vunpack.c.l.b16 %v185
    %v1006 = vunpack.c.l.b16 %v186
    %v1007 = vunpack.c.l.b16 %v187
    %v1008 = vunpack.c.l.b16 %v188
    %v1009 = vunpack.c.l.b16 %v189
    %v1010 = vunpack.c.l.b16 %v190
    %v1011 = vunpack.c.l.b16 %v191
    %v1012 = vunpack.c.l.b16 %v192
    %v1013 = vunpack.c.l.b16 %v193
    %v1014 = vunpack.c.l.b16 %v194
    %v1015 = vunpack.c.l.b16 %v195
    %v1016 = vunpack.c.l.b16 %v196
    %v1017 = vunpack.c.l.b16 %v197
    %v1018 = vpack.c.b16 %v1003, %v1002
    %v1019 = vpack.c.b16 %v1005, %v1004
    %v1020 = vpack.c.b16 %v1007, %v1006
    %v1021 = vpack.c.b16 %v1009, %v1008
    %v1022 = vpack.c.b16 %v1011, %v1010
    %v1023 = vpack.c.b16 %v1013, %v1012
    %v1024 = vpack.c.b16 %v1015, %v1014
    %v1025 = vpack.c.b16 %v1017, %v1016
    %1034 = vmatpush.bf16.msra.mxu0 %v1025
    %1035 = vmatpush.bf16.msra.mxu0 %v1024
    %1036 = vmatpush.bf16.msra.mxu0 %v1023
    %1037 = vmatpush.bf16.msra.mxu0 %v1022
    %1038 = vmatpush.bf16.msra.mxu0 %v1021
    %1039 = vmatpush.bf16.msra.mxu0 %v1020
    %1040 = vmatpush.bf16.msra.mxu0 %v1019
    %1041 = vmatpush.bf16.msra.mxu0 %v1018
    %1042 = vmatmul.bf16.gmra.mxu0 %v983
    %v1043 = vpop.f32.mrf.mxu0
    %v1044 = vadd.f32 %v984, %v1043
    %v1045 = vpop.f32.mrf.mxu0
    %v1046 = vadd.f32 %v985, %v1045
    %1047 = vdwg.mxu0
    %1048 = vst [vmem:[#allocation7] sm:$0xff] %v1044
    %1049 = vst [vmem:[#allocation7 + $0x8] sm:$0xff] %v1046
    // Predicated region
    $region22: #{tpu_custom_call.1} parent=1 // pred_check
      _
    $region23: #{tpu_custom_call.1} parent=1 // pred_check_branch
      %1051 = sbr.rel (0) target = $region25
    $region24: #{tpu_custom_call.1} parent=1 // pred_region
      %1053 = vsyncadd [#allocation4], 0
      %s1054 = sshll.u32 [#allocation7], 4
      %s1055 = int_to_ptr.vmem [resolvable:$true] %s1054
      %s1056 = sshll.u32 %s3, 4
      %s1057 = int_to_ptr.hbm [resolvable:$true] %s1056
      %1062 = dma.vmem_to_hbm [thread:$0]  %s1055, 256, %s1057, [#allocation4], 128, 128, 8
    $region25: #{tpu_custom_call.1} parent=1 // pred_fallthru
      _
    // Predicated region
    $region26: #{tpu_custom_call.1} parent=1 // pred_check
      _
    $region27: #{tpu_custom_call.1} parent=1 // pred_check_branch
      %1064 = sbr.rel (0) target = $region29
    $region28: #{tpu_custom_call.1} parent=1 // pred_region
      %1066 = dma.done [#allocation4], 256
    $region29: #{tpu_custom_call.1} parent=1 // pred_fallthru
      _
    %1067 = vsyncpa [#allocation3], 1
    %1068 = vsyncpa [#allocation6], 1
    %1069 = vsyncpa [#allocation4], 1

</llo_original>
